<compile_context>
chip_gen: v5e
topology: v5e:2x2
jax: 0.10.0
libtpu: 0.0.40
codegen_flags: <defaults>
</compile_context>

<pallas_src>
import functools

import jax
import jax.numpy as jnp
from jax.experimental import pallas as pl
from jax.experimental.pallas import tpu as pltpu

LANE = 128


def _round_up(x, m):
    return ((x + m - 1) // m) * m


def _nbytes(a):
    return a.size * a.dtype.itemsize


def actor_kernel(x_ref, w1_ref, b1_ref, w2_ref, b2_ref, wm_ref, bm_ref,
                 mean_ref):
    """Fused Mlp (2x Linear+Tanh) + Continuous mean head for one batch tile."""
    x = x_ref[...].astype(jnp.bfloat16)              # (TB, OBS)

    # Mlp layer 1: Linear -> Tanh (f32 accumulate, f32 bias/activation)
    h1 = jnp.dot(x, w1_ref[...], preferred_element_type=jnp.float32) + b1_ref[...]
    h1 = jnp.tanh(h1).astype(jnp.bfloat16)           # (TB, H1)

    # Mlp layer 2: Linear -> Tanh
    h2 = jnp.dot(h1, w2_ref[...], preferred_element_type=jnp.float32) + b2_ref[...]
    h2 = jnp.tanh(h2).astype(jnp.bfloat16)           # (TB, H2)

    # Continuous head: mean = Linear(h2), padded to 128 lanes for dense stores
    mean = jnp.dot(h2, wm_ref[...], preferred_element_type=jnp.float32) + bm_ref[...]
    mean_ref[...] = mean.astype(mean_ref.dtype)      # (TB, A_PAD)


@functools.partial(jax.jit, static_argnames=("block_b",))
def actor_forward(observations, params, *, block_b=512):
    """Wrapper: returns ((mean, std), states) like Actor.forward with rnn=None."""
    B, OBS = observations.shape
    H1 = params["w1"].shape[1]
    H2 = params["w2"].shape[1]
    A = params["logstd"].shape[1]        # true action dim
    A_pad = params["wm"].shape[1]        # lane-padded head width (multiple of 128)

    # Batch tile: multiple of 8 sublanes, capped by block_b (sweepable).
    tb = min(block_b, _round_up(B, 8))
    Bp = _round_up(B, tb)
    obs = observations
    if Bp != B:
        obs = jnp.pad(observations, ((0, Bp - B), (0, 0)))

    grid = (Bp // tb,)

    cost = pl.CostEstimate(
        flops=2 * Bp * (OBS * H1 + H1 * H2 + H2 * A_pad),
        transcendentals=Bp * (H1 + H2),
        bytes_accessed=(obs.size * obs.dtype.itemsize
                        + Bp * A_pad * 4
                        + sum(_nbytes(params[k])
                              for k in ("w1", "b1", "w2", "b2", "wm", "bm"))),
    )

    mean_padded = pl.pallas_call(
        actor_kernel,
        out_shape=jax.ShapeDtypeStruct((Bp, A_pad), jnp.float32),
        grid=grid,
        in_specs=[
            pl.BlockSpec((tb, OBS), lambda i: (i, 0)),    # obs tile, pipelined
            pl.BlockSpec((OBS, H1), lambda i: (0, 0)),    # weights resident
            pl.BlockSpec((1, H1), lambda i: (0, 0)),
            pl.BlockSpec((H1, H2), lambda i: (0, 0)),
            pl.BlockSpec((1, H2), lambda i: (0, 0)),
            pl.BlockSpec((H2, A_pad), lambda i: (0, 0)),
            pl.BlockSpec((1, A_pad), lambda i: (0, 0)),
        ],
        out_specs=pl.BlockSpec((tb, A_pad), lambda i: (i, 0)),
        compiler_params=pltpu.CompilerParams(
            dimension_semantics=("parallel",),     # shard batch across TCs (v7x)
            vmem_limit_bytes=32 * 1024 * 1024,     # safe on v7x's 64 MiB VMEM
        ),
        cost_estimate=cost,
    )(
        obs,
        params["w1"], params["b1"],
        params["w2"], params["b2"],
        params["wm"], params["bm"],
    )

    mean = mean_padded[:B, :A]
    # std is observation-independent: compute once outside the kernel.
    std = jnp.broadcast_to(jnp.exp(params["logstd"]), (B, A))
    states = None  # rnn=None branch: states are passed through unchanged
    return (mean, std), states


def init_params(key, obs_dim, hidden_sizes, action_dim):
    """Deterministic synthetic parameter init (shapes follow the nn.Module).

    Weights are stored transposed vs PyTorch, i.e. (in_features, out_features),
    in bf16 (MXU-native); the mean head is zero-padded to a 128-lane multiple.
    """
    h1, h2 = hidden_sizes
    a_pad = _round_up(action_dim, LANE)
    ks = jax.random.split(key, 6)
    scale = 0.1
    w1 = scale * jax.random.normal(ks[0], (obs_dim, h1), jnp.float32)
    b1 = scale * jax.random.normal(ks[1], (1, h1), jnp.float32)
    w2 = scale * jax.random.normal(ks[2], (h1, h2), jnp.float32)
    b2 = scale * jax.random.normal(ks[3], (1, h2), jnp.float32)
    wm = scale * jax.random.normal(ks[4], (h2, action_dim), jnp.float32)
    bm = scale * jax.random.normal(ks[5], (1, action_dim), jnp.float32)
    wm_pad = jnp.zeros((h2, a_pad), jnp.float32).at[:, :action_dim].set(wm)
    bm_pad = jnp.zeros((1, a_pad), jnp.float32).at[:, :action_dim].set(bm)
    return {
        "w1": w1.astype(jnp.bfloat16),
        "b1": b1,
        "w2": w2.astype(jnp.bfloat16),
        "b2": b2,
        "wm": wm_pad.astype(jnp.bfloat16),
        "bm": bm_pad,
        "logstd": jnp.zeros((1, action_dim), jnp.float32),  # nn.Parameter(zeros(A))
    }


def reference_forward(observations, params):
    """Pure-JAX f32 reference (same bf16-stored weights, f32 compute)."""
    A = params["logstd"].shape[1]
    w1 = params["w1"].astype(jnp.float32)
    w2 = params["w2"].astype(jnp.float32)
    wm = params["wm"].astype(jnp.float32)
    h1 = jnp.tanh(observations @ w1 + params["b1"])
    h2 = jnp.tanh(h1 @ w2 + params["b2"])
    mean = (h2 @ wm + params["bm"])[:, :A]
    std = jnp.broadcast_to(jnp.exp(params["logstd"]), mean.shape)
    return mean, std


if __name__ == "__main__":
    OBS, HIDDEN, ACT, BATCH = 16, [32, 32], 4, 8

    key = jax.random.PRNGKey(0)
    k_obs, k_par = jax.random.split(key)
    obs = jax.random.normal(k_obs, (BATCH, OBS), jnp.float32)
    params = init_params(k_par, OBS, HIDDEN, ACT)

    (mean, std), states = actor_forward(obs, params)
    jax.block_until_ready((mean, std))

    ref_mean, ref_std = reference_forward(obs, params)
    assert mean.shape == (BATCH, ACT) and std.shape == (BATCH, ACT)
    # bf16 weights/activations in the dots -> loosened tolerance vs f32 reference
    assert jnp.allclose(mean, ref_mean, atol=2e-2, rtol=2e-2)
    assert jnp.allclose(std, ref_std, atol=1e-6, rtol=1e-6)
    assert states is None

    print("KERNEL_OK")
</pallas_src>

<mosaic_0001>
module attributes {stable_mosaic.version = 11 : i64} {
  func.func @actor_kernel(%arg0: i32, %arg1: memref<8x16xf32, #tpu.memory_space<vmem>>, %arg2: memref<16x32xbf16, #tpu.memory_space<vmem>>, %arg3: memref<1x32xf32, #tpu.memory_space<vmem>>, %arg4: memref<32x32xbf16, #tpu.memory_space<vmem>>, %arg5: memref<1x32xf32, #tpu.memory_space<vmem>>, %arg6: memref<32x128xbf16, #tpu.memory_space<vmem>>, %arg7: memref<1x128xf32, #tpu.memory_space<vmem>>, %arg8: memref<8x128xf32, #tpu.memory_space<vmem>>) attributes {dimension_semantics = [#tpu.dimension_semantics<parallel>], iteration_bounds = array<i64: 1>, scalar_prefetch = 0 : i64, scratch_operands = 0 : i64, tpu.core_type = #tpu.core_type<tc>, window_params = [{transform_indices = @transform_0, window_bounds = array<i64: 8, 16>}, {pipeline_mode = #tpu.pipeline_mode<synchronous>, transform_indices = @transform_1, window_bounds = array<i64: 16, 32>}, {pipeline_mode = #tpu.pipeline_mode<synchronous>, transform_indices = @transform_2, window_bounds = array<i64: 1, 32>}, {pipeline_mode = #tpu.pipeline_mode<synchronous>, transform_indices = @transform_3, window_bounds = array<i64: 32, 32>}, {pipeline_mode = #tpu.pipeline_mode<synchronous>, transform_indices = @transform_4, window_bounds = array<i64: 1, 32>}, {pipeline_mode = #tpu.pipeline_mode<synchronous>, transform_indices = @transform_5, window_bounds = array<i64: 32, 128>}, {pipeline_mode = #tpu.pipeline_mode<synchronous>, transform_indices = @transform_6, window_bounds = array<i64: 1, 128>}, {transform_indices = @transform_7, window_bounds = array<i64: 8, 128>}]} {
    %c0 = arith.constant 0 : index
    %c0_0 = arith.constant 0 : index
    %0 = vector.load %arg1[%c0, %c0_0] : memref<8x16xf32, #tpu.memory_space<vmem>>, vector<8x16xf32>
    %1 = arith.truncf %0 : vector<8x16xf32> to vector<8x16xbf16>
    %c0_1 = arith.constant 0 : index
    %c0_2 = arith.constant 0 : index
    %2 = vector.load %arg2[%c0_1, %c0_2] : memref<16x32xbf16, #tpu.memory_space<vmem>>, vector<16x32xbf16>
    %cst = arith.constant dense<0.000000e+00> : vector<8x32xf32>
    %3 = tpu.matmul %1, %2, %cst {dimension_numbers = #tpu.dot_dimension_numbers<[1], [0], [0], [1], [0, 0, 1, 1], [], []>} : vector<8x16xbf16>, vector<16x32xbf16>, vector<8x32xf32> -> vector<8x32xf32>
    %c0_3 = arith.constant 0 : index
    %c0_4 = arith.constant 0 : index
    %4 = vector.load %arg3[%c0_3, %c0_4] : memref<1x32xf32, #tpu.memory_space<vmem>>, vector<1x32xf32>
    %5 = vector.broadcast %4 : vector<1x32xf32> to vector<8x32xf32>
    %6 = arith.addf %3, %5 : vector<8x32xf32>
    %7 = math.tanh %6 : vector<8x32xf32>
    %8 = arith.truncf %7 : vector<8x32xf32> to vector<8x32xbf16>
    %c0_5 = arith.constant 0 : index
    %c0_6 = arith.constant 0 : index
    %9 = vector.load %arg4[%c0_5, %c0_6] : memref<32x32xbf16, #tpu.memory_space<vmem>>, vector<32x32xbf16>
    %cst_7 = arith.constant dense<0.000000e+00> : vector<8x32xf32>
    %10 = tpu.matmul %8, %9, %cst_7 {dimension_numbers = #tpu.dot_dimension_numbers<[1], [0], [0], [1], [0, 0, 1, 1], [], []>} : vector<8x32xbf16>, vector<32x32xbf16>, vector<8x32xf32> -> vector<8x32xf32>
    %c0_8 = arith.constant 0 : index
    %c0_9 = arith.constant 0 : index
    %11 = vector.load %arg5[%c0_8, %c0_9] : memref<1x32xf32, #tpu.memory_space<vmem>>, vector<1x32xf32>
    %12 = vector.broadcast %11 : vector<1x32xf32> to vector<8x32xf32>
    %13 = arith.addf %10, %12 : vector<8x32xf32>
    %14 = math.tanh %13 : vector<8x32xf32>
    %15 = arith.truncf %14 : vector<8x32xf32> to vector<8x32xbf16>
    %c0_10 = arith.constant 0 : index
    %c0_11 = arith.constant 0 : index
    %16 = vector.load %arg6[%c0_10, %c0_11] : memref<32x128xbf16, #tpu.memory_space<vmem>>, vector<32x128xbf16>
    %cst_12 = arith.constant dense<0.000000e+00> : vector<8x128xf32>
    %17 = tpu.matmul %15, %16, %cst_12 {dimension_numbers = #tpu.dot_dimension_numbers<[1], [0], [0], [1], [0, 0, 1, 1], [], []>} : vector<8x32xbf16>, vector<32x128xbf16>, vector<8x128xf32> -> vector<8x128xf32>
    %c0_13 = arith.constant 0 : index
    %c0_14 = arith.constant 0 : index
    %18 = vector.load %arg7[%c0_13, %c0_14] : memref<1x128xf32, #tpu.memory_space<vmem>>, vector<1x128xf32>
    %19 = vector.broadcast %18 : vector<1x128xf32> to vector<8x128xf32>
    %20 = arith.addf %17, %19 : vector<8x128xf32>
    %c0_15 = arith.constant 0 : index
    %c0_16 = arith.constant 0 : index
    %21 = vector.load %arg8[%c0_15, %c0_16] : memref<8x128xf32, #tpu.memory_space<vmem>>, vector<8x128xf32>
    tpu.vector_store %arg8[%c0_15, %c0_16], %20 {strides = array<i32>} : memref<8x128xf32, #tpu.memory_space<vmem>>, vector<8x128xf32>,
    return
  }
  func.func @transform_0(%arg0: i32) -> (i32, i32) {
    %c0_i32 = arith.constant 0 : i32
    %c0_i32_0 = arith.constant 0 : i32
    return %arg0, %c0_i32 : i32, i32
  }
  func.func @transform_1(%arg0: i32) -> (i32, i32) {
    %c0_i32 = arith.constant 0 : i32
    %c0_i32_0 = arith.constant 0 : i32
    %c0_i32_1 = arith.constant 0 : i32
    return %c0_i32, %c0_i32_0 : i32, i32
  }
  func.func @transform_2(%arg0: i32) -> (i32, i32) {
    %c0_i32 = arith.constant 0 : i32
    %c0_i32_0 = arith.constant 0 : i32
    %c0_i32_1 = arith.constant 0 : i32
    return %c0_i32, %c0_i32_0 : i32, i32
  }
  func.func @transform_3(%arg0: i32) -> (i32, i32) {
    %c0_i32 = arith.constant 0 : i32
    %c0_i32_0 = arith.constant 0 : i32
    %c0_i32_1 = arith.constant 0 : i32
    return %c0_i32, %c0_i32_0 : i32, i32
  }
  func.func @transform_4(%arg0: i32) -> (i32, i32) {
    %c0_i32 = arith.constant 0 : i32
    %c0_i32_0 = arith.constant 0 : i32
    %c0_i32_1 = arith.constant 0 : i32
    return %c0_i32, %c0_i32_0 : i32, i32
  }
  func.func @transform_5(%arg0: i32) -> (i32, i32) {
    %c0_i32 = arith.constant 0 : i32
    %c0_i32_0 = arith.constant 0 : i32
    %c0_i32_1 = arith.constant 0 : i32
    return %c0_i32, %c0_i32_0 : i32, i32
  }
  func.func @transform_6(%arg0: i32) -> (i32, i32) {
    %c0_i32 = arith.constant 0 : i32
    %c0_i32_0 = arith.constant 0 : i32
    %c0_i32_1 = arith.constant 0 : i32
    return %c0_i32, %c0_i32_0 : i32, i32
  }
  func.func @transform_7(%arg0: i32) -> (i32, i32) {
    %c0_i32 = arith.constant 0 : i32
    %c0_i32_0 = arith.constant 0 : i32
    return %arg0, %c0_i32 : i32, i32
  }
}

</mosaic_0001>

<llo_original>
// kernel: actor_forward.1
$region0: #{actor_forward.1}
  #allocation0 [shape = 'u32[]', space=smem, size = 0x4, offset = 0x4, fixed_abs, tag = 'smem constant byte address 0x4 - core index']
  #allocation1 [shape = 'u32[72,128]{1,0:T(1,128)}', space=vmem, size = 0x9000, scoped, tag = 'internal scratch']
  %s0 = inlined_call_operand.hbm [shape: f32[8,16], index: 0, kind: input, shape index: {}]
  %s1 = inlined_call_operand.hbm [shape: bf16[16,32], index: 1, kind: input, shape index: {}]
  %s2 = inlined_call_operand.vmem [shape: f32[1,32], index: 2, kind: input, shape index: {}]
  %s3 = inlined_call_operand.hbm [shape: bf16[32,32], index: 3, kind: input, shape index: {}]
  %s4 = inlined_call_operand.vmem [shape: f32[1,32], index: 4, kind: input, shape index: {}]
  %s5 = inlined_call_operand.hbm [shape: bf16[32,128], index: 5, kind: input, shape index: {}]
  %s6 = inlined_call_operand.vmem [shape: f32[1,128], index: 6, kind: input, shape index: {}]
  %s7 = inlined_call_operand.vmem [shape: f32[8,128], index: 7, kind: output, shape index: {}]
  %s8 = sld [smem:[#allocation0]]
  $region54: #{actor_forward.1} parent=0
    _
  %s10 = ssub.s32 1, %s8
  %s11 = scalar_select 0, %s10, %s8
  $region1: #{actor_forward.1} parent=0
    #allocation2 [shape = 'u8[4096]{0}', space=vmem, size = 0x1000, scoped, tag = 'input window, operand 0, single buffered']
    #allocation3 [shape = 's32[1]{0}', space=sflag, size = 0x4, scoped, tag = 'scoped memory for actor_forward.1']
    #allocation4 [shape = 'u8[4096]{0}', space=vmem, size = 0x1000, scoped, tag = 'input window, operand 1, single buffered']
    #allocation5 [shape = 's32[1]{0}', space=sflag, size = 0x4, scoped, tag = 'scoped memory for actor_forward.1']
    #allocation6 [shape = 'u8[8192]{0}', space=vmem, size = 0x2000, scoped, tag = 'input window, operand 3, single buffered']
    #allocation7 [shape = 'u8[8192]{0}', space=vmem, size = 0x2000, scoped, tag = 'input window, operand 5, single buffered']
    #allocation8 [shape = 's32[1]{0}', space=sflag, size = 0x4, scoped, tag = 'scoped memory for actor_forward.1']
    %12 = vsyncpa [#allocation3], 0
    %13 = vsyncpa [#allocation5], 0
    %14 = vsyncpa [#allocation8], 0
    // Predicated region
    $region2: #{actor_forward.1} parent=1 // pred_check
      _
    $region3: #{actor_forward.1} parent=1 // pred_check_branch
      %16 = sbr.rel (0) target = $region5
    $region4: #{actor_forward.1} parent=1 // pred_region
      %18 = vsyncadd [#allocation3], 0
      %s20 = sshll.u32 %s0, 4
      %s21 = int_to_ptr.hbm [resolvable:$true] %s20
      %s22 = sshll.u32 [#allocation2], 4
      %s23 = int_to_ptr.vmem [resolvable:$true] %s22
      %25 = dma.hbm_to_vmem [thread:$0]  %s21, 128, %s23, [#allocation3]
    $region5: #{actor_forward.1} parent=1 // pred_fallthru
      _
    // Predicated region
    $region6: #{actor_forward.1} parent=1 // pred_check
      _
    $region7: #{actor_forward.1} parent=1 // pred_check_branch
      %27 = sbr.rel (0) target = $region9
    $region8: #{actor_forward.1} parent=1 // pred_region
      %29 = vsyncadd [#allocation5], 0
      %s30 = sshll.u32 %s1, 4
      %s31 = int_to_ptr.hbm [resolvable:$true] %s30
      %s32 = sshll.u32 [#allocation4], 4
      %s33 = int_to_ptr.vmem [resolvable:$true] %s32
      %38 = dma.hbm_to_vmem [thread:$0]  %s31, 128, %s33, [#allocation5], 64, 64, 4
    $region9: #{actor_forward.1} parent=1 // pred_fallthru
      _
    // Predicated region
    $region10: #{actor_forward.1} parent=1 // pred_check
      _
    $region11: #{actor_forward.1} parent=1 // pred_check_branch
      %40 = sbr.rel (0) target = $region13
    $region12: #{actor_forward.1} parent=1 // pred_region
      _
    $region13: #{actor_forward.1} parent=1 // pred_fallthru
      _
    // Predicated region
    $region14: #{actor_forward.1} parent=1 // pred_check
      _
    $region15: #{actor_forward.1} parent=1 // pred_check_branch
      %42 = sbr.rel (0) target = $region17
    $region16: #{actor_forward.1} parent=1 // pred_region
      %44 = vsyncadd [#allocation5], 0
      %s45 = sshll.u32 %s3, 4
      %s46 = int_to_ptr.hbm [resolvable:$true] %s45
      %s47 = sshll.u32 [#allocation6], 4
      %s48 = int_to_ptr.vmem [resolvable:$true] %s47
      %53 = dma.hbm_to_vmem [thread:$0]  %s46, 256, %s48, [#allocation5], 64, 64, 4
    $region17: #{actor_forward.1} parent=1 // pred_fallthru
      _
    // Predicated region
    $region18: #{actor_forward.1} parent=1 // pred_check
      _
    $region19: #{actor_forward.1} parent=1 // pred_check_branch
      %55 = sbr.rel (0) target = $region21
    $region20: #{actor_forward.1} parent=1 // pred_region
      _
    $region21: #{actor_forward.1} parent=1 // pred_fallthru
      _
    // Predicated region
    $region22: #{actor_forward.1} parent=1 // pred_check
      _
    $region23: #{actor_forward.1} parent=1 // pred_check_branch
      %57 = sbr.rel (0) target = $region25
    $region24: #{actor_forward.1} parent=1 // pred_region
      %59 = vsyncadd [#allocation8], 0
      %s60 = sshll.u32 %s5, 4
      %s61 = int_to_ptr.hbm [resolvable:$true] %s60
      %s62 = sshll.u32 [#allocation7], 4
      %s63 = int_to_ptr.vmem [resolvable:$true] %s62
      %68 = dma.hbm_to_vmem [thread:$0]  %s61, 256, %s63, [#allocation8], 64, 64, 4
    $region25: #{actor_forward.1} parent=1 // pred_fallthru
      _
    // Predicated region
    $region26: #{actor_forward.1} parent=1 // pred_check
      _
    $region27: #{actor_forward.1} parent=1 // pred_check_branch
      %70 = sbr.rel (0) target = $region29
    $region28: #{actor_forward.1} parent=1 // pred_region
      _
    $region29: #{actor_forward.1} parent=1 // pred_fallthru
      _
    // Predicated region
    $region30: #{actor_forward.1} parent=1 // pred_check
      _
    $region31: #{actor_forward.1} parent=1 // pred_check_branch
      %72 = sbr.rel (0) target = $region33
    $region32: #{actor_forward.1} parent=1 // pred_region
      %74 = dma.done [#allocation3], 128
    $region33: #{actor_forward.1} parent=1 // pred_fallthru
      _
    // Predicated region
    $region34: #{actor_forward.1} parent=1 // pred_check
      _
    $region35: #{actor_forward.1} parent=1 // pred_check_branch
      %76 = sbr.rel (0) target = $region37
    $region36: #{actor_forward.1} parent=1 // pred_region
      %78 = dma.done [#allocation5], 128
    $region37: #{actor_forward.1} parent=1 // pred_fallthru
      _
    // Predicated region
    $region38: #{actor_forward.1} parent=1 // pred_check
      _
    $region39: #{actor_forward.1} parent=1 // pred_check_branch
      %80 = sbr.rel (0) target = $region41
    $region40: #{actor_forward.1} parent=1 // pred_region
      %82 = dma.done [#allocation5], 256
    $region41: #{actor_forward.1} parent=1 // pred_fallthru
      _
    // Predicated region
    $region42: #{actor_forward.1} parent=1 // pred_check
      _
    $region43: #{actor_forward.1} parent=1 // pred_check_branch
      %84 = sbr.rel (0) target = $region45
    $region44: #{actor_forward.1} parent=1 // pred_region
      %86 = dma.done [#allocation8], 256
    $region45: #{actor_forward.1} parent=1 // pred_fallthru
      _
    %v88 = vld [vmem:[#allocation2] sm:$0xff]
    %v89 = vpack.c.bf16 %v88, %v88
    %v90 = vld [vmem:[#allocation4] sm:$0xf]
    %v91 = vld [vmem:[#allocation4 + $0x4] sm:$0xf]
    %v92 = vld [vmem:[%s2] sm:$0x1]
    %v94 = vperm.slane %v92, 0
    %v98 = vunpack.c.l.b16 %v90
    %v99 = vunpack.c.l.b16 %v91
    %v100 = vpack.c.b16 %v99, %v98
    %vm102 = vcmask 130048
    %v104 = vsel %vm102, %v89, 0
    %106 = vmatpush.bf16.msra.mxu0 0
    %107 = vmatpush.bf16.msra.mxu0 0
    %108 = vmatpush.bf16.msra.mxu0 0
    %109 = vmatpush.bf16.msra.mxu0 0
    %110 = vmatpush.bf16.msra.mxu0 0
    %111 = vmatpush.bf16.msra.mxu0 0
    %112 = vmatpush.bf16.msra.mxu0 0
    %113 = vmatpush.bf16.msra.mxu0 %v100
    %114 = vmatmul.bf16.gmra.mxu0 %v104
    %v115 = vpop.f32.mrf.mxu0
    %v116 = vadd.f32 %v94, %v115
    %v117 = vpop.f32.mrf.mxu0
    %118 = vdwg.mxu0
    %v119 = vtanh.pop %v116
    %v120 = vpack.c.bf16 %v119, %v119
    %v121 = vld [vmem:[#allocation6] sm:$0xf]
    %v122 = vld [vmem:[#allocation6 + $0x4] sm:$0xf]
    %v123 = vld [vmem:[#allocation6 + $0x8] sm:$0xf]
    %v124 = vld [vmem:[#allocation6 + $0xc] sm:$0xf]
    %v125 = vld [vmem:[%s4] sm:$0x1]
    %v127 = vperm.slane %v125, 0
    %v133 = vunpack.c.l.b16 %v121
    %v134 = vunpack.c.l.b16 %v122
    %v135 = vunpack.c.l.b16 %v123
    %v136 = vunpack.c.l.b16 %v124
    %v137 = vpack.c.b16 %v134, %v133
    %v138 = vpack.c.b16 %v136, %v135
    %vm141 = vcmask 261120
    %v143 = vsel %vm141, %v120, 0
    %145 = vmatpush.bf16.msra.mxu0 0
    %146 = vmatpush.bf16.msra.mxu0 0
    %147 = vmatpush.bf16.msra.mxu0 0
    %148 = vmatpush.bf16.msra.mxu0 0
    %149 = vmatpush.bf16.msra.mxu0 0
    %150 = vmatpush.bf16.msra.mxu0 0
    %151 = vmatpush.bf16.msra.mxu0 %v138
    %152 = vmatpush.bf16.msra.mxu0 %v137
    %153 = vmatmul.bf16.gmra.mxu0 %v143
    %v154 = vpop.f32.mrf.mxu0
    %v155 = vadd.f32 %v127, %v154
    %v156 = vpop.f32.mrf.mxu0
    %157 = vdwg.mxu0
    %v158 = vtanh.pop %v155
    %v159 = vpack.c.bf16 %v158, %v158
    %v160 = vld [vmem:[#allocation7] sm:$0xf]
    %v161 = vld [vmem:[#allocation7 + $0x4] sm:$0xf]
    %v162 = vld [vmem:[#allocation7 + $0x8] sm:$0xf]
    %v163 = vld [vmem:[#allocation7 + $0xc] sm:$0xf]
    %v164 = vld [vmem:[%s6] sm:$0x1]
    %v166 = vperm.slane %v164, 0
    %v172 = vunpack.c.l.b16 %v160
    %v173 = vunpack.c.l.b16 %v161
    %v174 = vunpack.c.l.b16 %v162
    %v175 = vunpack.c.l.b16 %v163
    %v176 = vpack.c.b16 %v173, %v172
    %v177 = vpack.c.b16 %v175, %v174
    %v181 = vsel %vm141, %v159, 0
    %183 = vmatpush.bf16.msra.mxu0 0
    %184 = vmatpush.bf16.msra.mxu0 0
    %185 = vmatpush.bf16.msra.mxu0 0
    %186 = vmatpush.bf16.msra.mxu0 0
    %187 = vmatpush.bf16.msra.mxu0 0
    %188 = vmatpush.bf16.msra.mxu0 0
    %189 = vmatpush.bf16.msra.mxu0 %v177
    %190 = vmatpush.bf16.msra.mxu0 %v176
    %191 = vmatmul.bf16.gmra.mxu0 %v181
    %v192 = vpop.f32.mrf.mxu0
    %v193 = vadd.f32 %v166, %v192
    %v194 = vpop.f32.mrf.mxu0
    %195 = vdwg.mxu0
    %196 = vst [vmem:[%s7] sm:$0xff] %v193
    // Predicated region
    $region46: #{actor_forward.1} parent=1 // pred_check
      _
    $region47: #{actor_forward.1} parent=1 // pred_check_branch
      %198 = sbr.rel (0) target = $region49
    $region48: #{actor_forward.1} parent=1 // pred_region
      _
    $region49: #{actor_forward.1} parent=1 // pred_fallthru
      _
    // Predicated region
    $region50: #{actor_forward.1} parent=1 // pred_check
      _
    $region51: #{actor_forward.1} parent=1 // pred_check_branch
      %200 = sbr.rel (0) target = $region53
    $region52: #{actor_forward.1} parent=1 // pred_region
      _
    $region53: #{actor_forward.1} parent=1 // pred_fallthru
      _
    %201 = vsyncpa [#allocation3], 1
    %202 = vsyncpa [#allocation5], 1
    %203 = vsyncpa [#allocation8], 1

</llo_original>
